<compile_context>
chip_gen: v6e
topology: v6e:2x2x1
jax: 0.10.0
libtpu: 0.0.40
codegen_flags: <defaults>
</compile_context>

<pallas_src>
import jax
import jax.numpy as jnp
from jax.experimental import pallas as pl
from jax.experimental.pallas import tpu as pltpu

LANES = 128
MAX_TILE_ROWS = 512   # (512, 128) f32 = 256 KiB per stream
NUM_SPLITS = 2        # leading "parallel" grid axis (engages both TCs on v7x)


def _round_up(x, m):
    return ((x + m - 1) // m) * m


def _make_kernel(n, tile_rows, tiles_per_split):
    """n, tile_rows, tiles_per_split are Python ints baked into the kernel."""

    def kernel(eps_ref, y_obs_ref, y_pred_ref, t_obs_ref, t_pred_ref,
               out_ref, acc_ref):
        c = pl.program_id(0)   # split ("parallel")
        i = pl.program_id(1)   # tile within split ("arbitrary", reduction)

        @pl.when(i == 0)
        def _():
            acc_ref[...] = jnp.zeros_like(acc_ref)

        eps = eps_ref[0]                                   # scalar from SMEM
        t_pred_c = (t_pred_ref[...] + 0.01) * (1.0 / 1.02)
        t_obs = t_obs_ref[...]
        # Fused form of t_obs/p - (1-t_obs)/(1-p): one divide instead of two.
        diff = (t_obs - t_pred_c) / (t_pred_c * (1.0 - t_pred_c))
        resid = y_obs_ref[...] - (y_pred_ref[...] + diff * eps)

        # Mask out the padded tail (flat index >= n contributes 0).
        row0 = (c * tiles_per_split + i) * tile_rows
        row = jax.lax.broadcasted_iota(jnp.int32, resid.shape, 0) + row0
        lane = jax.lax.broadcasted_iota(jnp.int32, resid.shape, 1)
        flat = row * LANES + lane
        resid = jnp.where(flat < n, resid, 0.0)

        # Pure-VPU elementwise accumulation; no per-step XLU reduction.
        acc_ref[...] += resid * resid

        @pl.when(i == tiles_per_split - 1)
        def _():
            total = jnp.sum(acc_ref[...])                  # XLU reduce, once per split
            orow = jax.lax.broadcasted_iota(jnp.int32, out_ref.shape, 0)
            olane = jax.lax.broadcasted_iota(jnp.int32, out_ref.shape, 1)
            out_ref[...] = jnp.where((orow == 0) & (olane == 0), total, 0.0)

    return kernel


def targeted_loss(y_obs, y_pred, t_obs, t_pred, epsilon):
    """Pallas equivalent of TargetedLoss.forward. Returns a scalar f32."""
    y_obs = jnp.asarray(y_obs, jnp.float32).reshape(-1)
    y_pred = jnp.asarray(y_pred, jnp.float32).reshape(-1)
    t_obs = jnp.asarray(t_obs, jnp.float32).reshape(-1)
    t_pred = jnp.asarray(t_pred, jnp.float32).reshape(-1)
    n = y_obs.shape[0]
    eps = jnp.asarray(epsilon, jnp.float32).reshape(-1)    # (1,) scalar in SMEM

    # Lane-dense padded layout: (padded_rows, 128).
    rows = -(-n // LANES)
    tile_rows = min(MAX_TILE_ROWS, _round_up(max(rows, 1), 8))
    padded_rows = _round_up(rows, tile_rows * NUM_SPLITS)
    padded = padded_rows * LANES
    tiles_per_split = padded_rows // (tile_rows * NUM_SPLITS)

    def pad2d(x, fill):
        x = jnp.pad(x, (0, padded - n), constant_values=fill)
        return x.reshape(padded_rows, LANES)

    y_obs_p = pad2d(y_obs, 0.0)
    y_pred_p = pad2d(y_pred, 0.0)
    t_obs_p = pad2d(t_obs, 0.0)
    t_pred_p = pad2d(t_pred, 0.5)   # keeps padded denominators finite (masked anyway)

    stream_spec = pl.BlockSpec(
        (tile_rows, LANES), lambda c, i: (c * tiles_per_split + i, 0))

    kernel = _make_kernel(n, tile_rows, tiles_per_split)

    partials = pl.pallas_call(
        kernel,
        out_shape=jax.ShapeDtypeStruct((NUM_SPLITS * 8, LANES), jnp.float32),
        grid=(NUM_SPLITS, tiles_per_split),
        in_specs=[pl.BlockSpec(memory_space=pltpu.MemorySpace.SMEM)]
                 + [stream_spec] * 4,
        out_specs=pl.BlockSpec((8, LANES), lambda c, i: (c, 0)),
        scratch_shapes=[pltpu.VMEM((tile_rows, LANES), jnp.float32)],
        compiler_params=pltpu.CompilerParams(
            dimension_semantics=("parallel", "arbitrary")),
    )(eps, y_obs_p, y_pred_p, t_obs_p, t_pred_p)

    # Each split wrote its partial sum-of-squares at [split*8, 0]; rest is zero.
    return jnp.sum(partials) / n


def targeted_loss_ref(y_obs, y_pred, t_obs, t_pred, epsilon):
    """Pure-JAX reference mirroring the PyTorch forward, for sanity checking."""
    t_pred = (t_pred + 0.01) / 1.02
    t1 = t_obs / t_pred
    t0 = (1.0 - t_obs) / (1.0 - t_pred)
    eps = epsilon.reshape(-1, 1)
    t = (t1 - t0) * eps
    pred = y_pred + t
    return jnp.mean((y_obs - pred) ** 2)


if __name__ == "__main__":
    key = jax.random.PRNGKey(0)
    for n in (8, 300):   # exercises both full masking of a split and a ragged tail
        k1, k2, k3, k4 = jax.random.split(jax.random.fold_in(key, n), 4)
        y_obs = jax.random.normal(k1, (n, 1), jnp.float32)
        y_pred = jax.random.normal(k2, (n, 1), jnp.float32)
        t_obs = (jax.random.uniform(k3, (n, 1)) > 0.5).astype(jnp.float32)
        t_pred = jax.random.uniform(k4, (n, 1), jnp.float32, minval=0.05, maxval=0.95)
        epsilon = jnp.array([0.1], dtype=jnp.float32)  # learnable scalar in the model

        loss = jax.block_until_ready(
            targeted_loss(y_obs, y_pred, t_obs, t_pred, epsilon))
        ref = targeted_loss_ref(y_obs, y_pred, t_obs, t_pred, epsilon)
        assert jnp.allclose(loss, ref, rtol=1e-4, atol=1e-6), (n, loss, ref)

    print("KERNEL_OK")
</pallas_src>

<mosaic_0001>
module attributes {stable_mosaic.version = 11 : i64} {
  func.func @kernel(%arg0: i32, %arg1: i32, %arg2: memref<1xf32, #tpu.memory_space<smem>>, %arg3: memref<8x128xf32, #tpu.memory_space<vmem>>, %arg4: memref<8x128xf32, #tpu.memory_space<vmem>>, %arg5: memref<8x128xf32, #tpu.memory_space<vmem>>, %arg6: memref<8x128xf32, #tpu.memory_space<vmem>>, %arg7: memref<8x128xf32, #tpu.memory_space<vmem>>, %arg8: memref<8x128xf32, #tpu.memory_space<vmem>>) attributes {dimension_semantics = [#tpu.dimension_semantics<parallel>, #tpu.dimension_semantics<arbitrary>], iteration_bounds = array<i64: 2, 1>, scalar_prefetch = 0 : i64, scratch_operands = 1 : i64, tpu.core_type = #tpu.core_type<tc>, window_params = [{transform_indices = @transform_0, window_bounds = array<i64: 1>}, {transform_indices = @transform_1, window_bounds = array<i64: 8, 128>}, {transform_indices = @transform_2, window_bounds = array<i64: 8, 128>}, {transform_indices = @transform_3, window_bounds = array<i64: 8, 128>}, {transform_indices = @transform_4, window_bounds = array<i64: 8, 128>}, {transform_indices = @transform_5, window_bounds = array<i64: 8, 128>}]} {
    %c0_i32 = arith.constant 0 : i32
    %0 = arith.cmpi eq, %arg1, %c0_i32 : i32
    %1 = arith.extui %0 : i1 to i32
    %c0_i32_0 = arith.constant 0 : i32
    %2 = arith.cmpi ne, %1, %c0_i32_0 : i32
    scf.if %2 {
      %cst_19 = arith.constant 0.000000e+00 : f32
      %42 = vector.broadcast %cst_19 : f32 to vector<8x128xf32>
      %c0_20 = arith.constant 0 : index
      %c0_21 = arith.constant 0 : index
      %43 = vector.load %arg8[%c0_20, %c0_21] : memref<8x128xf32, #tpu.memory_space<vmem>>, vector<8x128xf32>
      tpu.vector_store %arg8[%c0_20, %c0_21], %42 {strides = array<i32>} : memref<8x128xf32, #tpu.memory_space<vmem>>, vector<8x128xf32>,
    } else {
    }
    %c0 = arith.constant 0 : index
    %3 = memref.load %arg2[%c0] : memref<1xf32, #tpu.memory_space<smem>>
    %c0_1 = arith.constant 0 : index
    %c0_2 = arith.constant 0 : index
    %4 = vector.load %arg6[%c0_1, %c0_2] : memref<8x128xf32, #tpu.memory_space<vmem>>, vector<8x128xf32>
    %cst = arith.constant 0.00999999977 : f32
    %5 = vector.broadcast %cst : f32 to vector<8x128xf32>
    %6 = arith.addf %4, %5 : vector<8x128xf32>
    %cst_3 = arith.constant 0.980392158 : f32
    %7 = vector.broadcast %cst_3 : f32 to vector<8x128xf32>
    %8 = arith.mulf %6, %7 : vector<8x128xf32>
    %c0_4 = arith.constant 0 : index
    %c0_5 = arith.constant 0 : index
    %9 = vector.load %arg5[%c0_4, %c0_5] : memref<8x128xf32, #tpu.memory_space<vmem>>, vector<8x128xf32>
    %10 = arith.subf %9, %8 : vector<8x128xf32>
    %cst_6 = arith.constant 1.000000e+00 : f32
    %11 = vector.broadcast %cst_6 : f32 to vector<8x128xf32>
    %12 = arith.subf %11, %8 : vector<8x128xf32>
    %13 = arith.mulf %8, %12 : vector<8x128xf32>
    %14 = arith.divf %10, %13 : vector<8x128xf32>
    %c0_7 = arith.constant 0 : index
    %c0_8 = arith.constant 0 : index
    %15 = vector.load %arg3[%c0_7, %c0_8] : memref<8x128xf32, #tpu.memory_space<vmem>>, vector<8x128xf32>
    %c0_9 = arith.constant 0 : index
    %c0_10 = arith.constant 0 : index
    %16 = vector.load %arg4[%c0_9, %c0_10] : memref<8x128xf32, #tpu.memory_space<vmem>>, vector<8x128xf32>
    %17 = vector.broadcast %3 : f32 to vector<8x128xf32>
    %18 = arith.mulf %14, %17 : vector<8x128xf32>
    %19 = arith.addf %16, %18 : vector<8x128xf32>
    %20 = arith.subf %15, %19 : vector<8x128xf32>
    %c1_i32 = arith.constant 1 : i32
    %21 = arith.muli %arg0, %c1_i32 : i32
    %22 = arith.addi %21, %arg1 : i32
    %c8_i32 = arith.constant 8 : i32
    %23 = arith.muli %22, %c8_i32 : i32
    %24 = tpu.iota {dimensions = array<i32: 0>} : vector<8x128xi32>
    %25 = vector.broadcast %23 : i32 to vector<8x128xi32>
    %26 = arith.addi %24, %25 : vector<8x128xi32>
    %27 = tpu.iota {dimensions = array<i32: 1>} : vector<8x128xi32>
    %c128_i32 = arith.constant 128 : i32
    %28 = vector.broadcast %c128_i32 : i32 to vector<8x128xi32>
    %29 = arith.muli %26, %28 : vector<8x128xi32>
    %30 = arith.addi %29, %27 : vector<8x128xi32>
    %c8_i32_11 = arith.constant 8 : i32
    %31 = vector.broadcast %c8_i32_11 : i32 to vector<8x128xi32>
    %32 = arith.cmpi slt, %30, %31 : vector<8x128xi32>
    %cst_12 = arith.constant 0.000000e+00 : f32
    %33 = vector.broadcast %cst_12 : f32 to vector<8x128xf32>
    %34 = arith.select %32, %20, %33 : vector<8x128xi1>, vector<8x128xf32>
    %c0_13 = arith.constant 0 : index
    %c0_14 = arith.constant 0 : index
    %35 = vector.load %arg8[%c0_13, %c0_14] : memref<8x128xf32, #tpu.memory_space<vmem>>, vector<8x128xf32>
    %36 = arith.mulf %34, %34 : vector<8x128xf32>
    %37 = arith.addf %35, %36 : vector<8x128xf32>
    %c0_15 = arith.constant 0 : index
    %c0_16 = arith.constant 0 : index
    %38 = vector.load %arg8[%c0_15, %c0_16] : memref<8x128xf32, #tpu.memory_space<vmem>>, vector<8x128xf32>
    tpu.vector_store %arg8[%c0_15, %c0_16], %37 {strides = array<i32>} : memref<8x128xf32, #tpu.memory_space<vmem>>, vector<8x128xf32>,
    %c0_i32_17 = arith.constant 0 : i32
    %39 = arith.cmpi eq, %arg1, %c0_i32_17 : i32
    %40 = arith.extui %39 : i1 to i32
    %c0_i32_18 = arith.constant 0 : i32
    %41 = arith.cmpi ne, %40, %c0_i32_18 : i32
    scf.if %41 {
      %c0_19 = arith.constant 0 : index
      %c0_20 = arith.constant 0 : index
      %42 = vector.load %arg8[%c0_19, %c0_20] : memref<8x128xf32, #tpu.memory_space<vmem>>, vector<8x128xf32>
      %43 = vector.shape_cast %42 : vector<8x128xf32> to vector<1x8x128xf32>
      %cst_21 = arith.constant dense<0.000000e+00> : vector<1xf32>
      %44 = vector.multi_reduction <add>, %43, %cst_21 [1, 2] : vector<1x8x128xf32> to vector<1xf32>
      %45 = vector.shape_cast %44 : vector<1xf32> to vector<1x1x1xf32>
      %46 = vector.extract %45[0, 0, 0] : f32 from vector<1x1x1xf32>
      %47 = tpu.iota {dimensions = array<i32: 0>} : vector<8x128xi32>
      %48 = tpu.iota {dimensions = array<i32: 1>} : vector<8x128xi32>
      %c0_i32_22 = arith.constant 0 : i32
      %49 = vector.broadcast %c0_i32_22 : i32 to vector<8x128xi32>
      %50 = arith.cmpi eq, %47, %49 : vector<8x128xi32>
      %c0_i32_23 = arith.constant 0 : i32
      %51 = vector.broadcast %c0_i32_23 : i32 to vector<8x128xi32>
      %52 = arith.cmpi eq, %48, %51 : vector<8x128xi32>
      %53 = arith.andi %50, %52 : vector<8x128xi1>
      %cst_24 = arith.constant 0.000000e+00 : f32
      %54 = vector.broadcast %46 : f32 to vector<8x128xf32>
      %55 = vector.broadcast %cst_24 : f32 to vector<8x128xf32>
      %56 = arith.select %53, %54, %55 : vector<8x128xi1>, vector<8x128xf32>
      %c0_25 = arith.constant 0 : index
      %c0_26 = arith.constant 0 : index
      %57 = vector.load %arg7[%c0_25, %c0_26] : memref<8x128xf32, #tpu.memory_space<vmem>>, vector<8x128xf32>
      tpu.vector_store %arg7[%c0_25, %c0_26], %56 {strides = array<i32>} : memref<8x128xf32, #tpu.memory_space<vmem>>, vector<8x128xf32>,
    } else {
    }
    return
  }
  func.func @transform_0(%arg0: i32, %arg1: i32) -> i32 {
    %c0_i32 = arith.constant 0 : i32
    %c0_i32_0 = arith.constant 0 : i32
    return %c0_i32 : i32
  }
  func.func @transform_1(%arg0: i32, %arg1: i32) -> (i32, i32) {
    %c1_i32 = arith.constant 1 : i32
    %0 = arith.muli %arg0, %c1_i32 : i32
    %1 = arith.addi %0, %arg1 : i32
    %c0_i32 = arith.constant 0 : i32
    %c0_i32_0 = arith.constant 0 : i32
    return %1, %c0_i32 : i32, i32
  }
  func.func @transform_2(%arg0: i32, %arg1: i32) -> (i32, i32) {
    %c1_i32 = arith.constant 1 : i32
    %0 = arith.muli %arg0, %c1_i32 : i32
    %1 = arith.addi %0, %arg1 : i32
    %c0_i32 = arith.constant 0 : i32
    %c0_i32_0 = arith.constant 0 : i32
    return %1, %c0_i32 : i32, i32
  }
  func.func @transform_3(%arg0: i32, %arg1: i32) -> (i32, i32) {
    %c1_i32 = arith.constant 1 : i32
    %0 = arith.muli %arg0, %c1_i32 : i32
    %1 = arith.addi %0, %arg1 : i32
    %c0_i32 = arith.constant 0 : i32
    %c0_i32_0 = arith.constant 0 : i32
    return %1, %c0_i32 : i32, i32
  }
  func.func @transform_4(%arg0: i32, %arg1: i32) -> (i32, i32) {
    %c1_i32 = arith.constant 1 : i32
    %0 = arith.muli %arg0, %c1_i32 : i32
    %1 = arith.addi %0, %arg1 : i32
    %c0_i32 = arith.constant 0 : i32
    %c0_i32_0 = arith.constant 0 : i32
    return %1, %c0_i32 : i32, i32
  }
  func.func @transform_5(%arg0: i32, %arg1: i32) -> (i32, i32) {
    %c0_i32 = arith.constant 0 : i32
    %c0_i32_0 = arith.constant 0 : i32
    return %arg0, %c0_i32 : i32, i32
  }
}

</mosaic_0001>

<llo_original>
// kernel: tpu_custom_call.1
$region0: #{tpu_custom_call.1}
  #allocation0 [shape = 'u32[]', space=smem, size = 0x4, offset = 0x4, fixed_abs, tag = 'smem constant byte address 0x4 - core index']
  #allocation1 [shape = 'u32[144,128]{1,0:T(1,128)}', space=vmem, size = 0x12000, scoped, tag = 'internal scratch']
  #allocation2 [shape = 'f32[8,128]{1,0:T(8,128)}', space=vmem, size = 0x1000, scoped, tag = 'scratch operand']
  #allocation3 [shape = 'f32[1]{0:T(128)S(6)}', space=smem, size = 0x200, scoped, tag = 'scoped memory for tpu_custom_call.1']
  %s0 = inlined_call_operand.<no memory space> [shape: f32[1], index: 0, kind: input, shape index: {}]
  %s1 = inlined_call_operand.hbm [shape: f32[16,128], index: 1, kind: input, shape index: {}]
  %s2 = inlined_call_operand.hbm [shape: f32[16,128], index: 2, kind: input, shape index: {}]
  %s3 = inlined_call_operand.hbm [shape: f32[16,128], index: 3, kind: input, shape index: {}]
  %s4 = inlined_call_operand.hbm [shape: f32[16,128], index: 4, kind: input, shape index: {}]
  %s5 = inlined_call_operand.hbm [shape: f32[16,128], index: 5, kind: output, shape index: {}]
  %s6 = sld [smem:[#allocation0]]
  $region77: #{tpu_custom_call.1} parent=0
    _
  %s8 = ssub.s32 1, %s6
  %s9 = scalar_select 0, %s8, %s6
  %10 = sst [smem:[#allocation3]] %s0
  $region1: #{tpu_custom_call.1} parent=0
    #allocation4 [shape = 'u8[8192]{0}', space=vmem, size = 0x2000, scoped, tag = 'input window, operand 1']
    #allocation5 [shape = 's32[2]{0}', space=sflag, size = 0x8, scoped, tag = 'scoped memory for tpu_custom_call.1']
    #allocation6 [shape = 's32[2]{0}', space=sflag, size = 0x8, scoped, tag = 'scoped memory for tpu_custom_call.1']
    #allocation7 [shape = 'u8[8192]{0}', space=vmem, size = 0x2000, scoped, tag = 'input window, operand 2']
    #allocation8 [shape = 's32[2]{0}', space=sflag, size = 0x8, scoped, tag = 'scoped memory for tpu_custom_call.1']
    #allocation9 [shape = 'u8[8192]{0}', space=vmem, size = 0x2000, scoped, tag = 'input window, operand 3']
    #allocation10 [shape = 'u8[8192]{0}', space=vmem, size = 0x2000, scoped, tag = 'input window, operand 4']
    #allocation11 [shape = 's32[2]{0}', space=sflag, size = 0x8, scoped, tag = 'scoped memory for tpu_custom_call.1']
    #allocation12 [shape = 'u8[8192]{0}', space=vmem, size = 0x2000, scoped, tag = 'output window, operand 0']
    %11 = vsyncpa [#allocation5], 0
    %s12 = scalar_lea.sflag [#allocation5], 1
    %13 = vsyncpa %s12, 0
    %14 = vsyncpa [#allocation8], 0
    %s15 = scalar_lea.sflag [#allocation8], 1
    %16 = vsyncpa %s15, 0
    %17 = vsyncpa [#allocation11], 0
    %s18 = scalar_lea.sflag [#allocation11], 1
    %19 = vsyncpa %s18, 0
    %20 = vsyncpa [#allocation6], 0
    %s21 = scalar_lea.sflag [#allocation6], 1
    %22 = vsyncpa %s21, 0
    loop: start=0, step=1, limit=4
    $region2: #{tpu_custom_call.1} parent=1 // loop_pre_header
      _
    $region3: #{tpu_custom_call.1} parent=1 // loop_header
      %s24 = sphi 0, %s28
      %p25 = scmp.ge.s32.totalorder %s24, 4
      %s31 = sphi 0, %s43
      %s32 = sphi 0, %s39
      %s33 = sphi 0, %s31
      %s34 = sphi 0, %s32
      %s35 = sphi 0, %s33
      %s36 = sphi 0, %s34
      %s44 = sphi 0, %s44
      %s46 = sphi 0, %s44
      %s47 = sphi 0, %s46
      %s61 = sphi 0, %s47
      %s69 = sphi 0, %s71
      %s72 = sphi 0, %s69
      %s73 = sphi 0, %s72
      %s89 = sphi 0, %s73
      %s97 = sphi 0, %s99
      %s100 = sphi 0, %s97
      %s101 = sphi 0, %s100
      %s117 = sphi 0, %s101
      %s125 = sphi 0, %s127
      %s128 = sphi 0, %s125
      %s129 = sphi 0, %s128
      %s145 = sphi 0, %s129
      %s153 = sphi 0, %s155
      %s156 = sphi 0, %s153
      %s157 = sphi 0, %s156
      %s173 = sphi 0, %s157
      %s179 = sphi 0, %s181
      %s182 = sphi 0, %s179
      %s183 = sphi 0, %s182
      %s199 = sphi 0, %s183
    $region4: #{tpu_custom_call.1} parent=1 // loop_header_branch
      %27 = sbr.rel (%p25) target = $region8
    $region5: #{tpu_custom_call.1} parent=1 // loop_body
      %s29 = ssub.s32 %s24, 1
      %s30 = ssub.s32 %s24, 2
      %s37 = sadd.s32 1, %s32
      %p38 = scmp.ge.s32.totalorder %s37, 1
      %s39 = scalar_select %p38, 0, %s37
      %s40 = sadd.s32 1, %s31
      %s41 = scalar_select %p38, %s40, %s31
      %p42 = scmp.ge.s32.totalorder %s41, 2
      %s43 = scalar_select %p42, 0, %s41
      %s45 = sadd.s32 %s44, 1
      %p48 = scmp.eq.s32.totalorder %s24, 1
      %p49 = scmp.ne.s32.totalorder %s44, %s46
      %p50 = scmp.eq.s32.totalorder %s24, 0
      %p51 = por %p49, %p50
      %p52 = scmp.ne.s32.totalorder %s44, %s46
      %p53 = scmp.eq.s32.totalorder %s29, 1
      %p54 = por %p52, %p53
      %p55 = scmp.ne.s32.totalorder %s46, %s47
      %p56 = scmp.eq.s32.totalorder %s29, 0
      %p57 = por %p55, %p56
      %p58 = scmp.ne.s32.totalorder %s46, %s47
      %p59 = scmp.eq.s32.totalorder %s30, 1
      %p60 = por %p58, %p59
      %p62 = scmp.ne.s32.totalorder %s47, %s61
      %p63 = scmp.eq.s32.totalorder %s30, 0
      %p64 = por %p62, %p63
      %s65 = sadd.s32 %s31, %s32
      %s66 = sadd.s32 %s43, %s39
      %s67 = ssub.s32 %s65, %s66
      %p68 = scmp.eq.s32.totalorder %s67, 0
      %s70 = sadd.s32 %s69, 1
      %s71 = scalar_select %p68, %s69, %s70
      %p74 = pneg %p68
      %p75 = scmp.eq.s32.totalorder %s24, 1
      %p76 = por %p74, %p75
      %p77 = scmp.ne.s32.totalorder %s69, %s72
      %p78 = scmp.eq.s32.totalorder %s24, 0
      %p79 = por %p77, %p78
      %p80 = scmp.ne.s32.totalorder %s69, %s72
      %p81 = scmp.eq.s32.totalorder %s29, 1
      %p82 = por %p80, %p81
      %p83 = scmp.ne.s32.totalorder %s72, %s73
      %p84 = scmp.eq.s32.totalorder %s29, 0
      %p85 = por %p83, %p84
      %p86 = scmp.ne.s32.totalorder %s72, %s73
      %p87 = scmp.eq.s32.totalorder %s30, 1
      %p88 = por %p86, %p87
      %p90 = scmp.ne.s32.totalorder %s73, %s89
      %p91 = scmp.eq.s32.totalorder %s30, 0
      %p92 = por %p90, %p91
      %s93 = sadd.s32 %s31, %s32
      %s94 = sadd.s32 %s43, %s39
      %s95 = ssub.s32 %s93, %s94
      %p96 = scmp.eq.s32.totalorder %s95, 0
      %s98 = sadd.s32 %s97, 1
      %s99 = scalar_select %p96, %s97, %s98
      %p102 = pneg %p96
      %p103 = scmp.eq.s32.totalorder %s24, 1
      %p104 = por %p102, %p103
      %p105 = scmp.ne.s32.totalorder %s97, %s100
      %p106 = scmp.eq.s32.totalorder %s24, 0
      %p107 = por %p105, %p106
      %p108 = scmp.ne.s32.totalorder %s97, %s100
      %p109 = scmp.eq.s32.totalorder %s29, 1
      %p110 = por %p108, %p109
      %p111 = scmp.ne.s32.totalorder %s100, %s101
      %p112 = scmp.eq.s32.totalorder %s29, 0
      %p113 = por %p111, %p112
      %p114 = scmp.ne.s32.totalorder %s100, %s101
      %p115 = scmp.eq.s32.totalorder %s30, 1
      %p116 = por %p114, %p115
      %p118 = scmp.ne.s32.totalorder %s101, %s117
      %p119 = scmp.eq.s32.totalorder %s30, 0
      %p120 = por %p118, %p119
      %s121 = sadd.s32 %s31, %s32
      %s122 = sadd.s32 %s43, %s39
      %s123 = ssub.s32 %s121, %s122
      %p124 = scmp.eq.s32.totalorder %s123, 0
      %s126 = sadd.s32 %s125, 1
      %s127 = scalar_select %p124, %s125, %s126
      %p130 = pneg %p124
      %p131 = scmp.eq.s32.totalorder %s24, 1
      %p132 = por %p130, %p131
      %p133 = scmp.ne.s32.totalorder %s125, %s128
      %p134 = scmp.eq.s32.totalorder %s24, 0
      %p135 = por %p133, %p134
      %p136 = scmp.ne.s32.totalorder %s125, %s128
      %p137 = scmp.eq.s32.totalorder %s29, 1
      %p138 = por %p136, %p137
      %p139 = scmp.ne.s32.totalorder %s128, %s129
      %p140 = scmp.eq.s32.totalorder %s29, 0
      %p141 = por %p139, %p140
      %p142 = scmp.ne.s32.totalorder %s128, %s129
      %p143 = scmp.eq.s32.totalorder %s30, 1
      %p144 = por %p142, %p143
      %p146 = scmp.ne.s32.totalorder %s129, %s145
      %p147 = scmp.eq.s32.totalorder %s30, 0
      %p148 = por %p146, %p147
      %s149 = sadd.s32 %s31, %s32
      %s150 = sadd.s32 %s43, %s39
      %s151 = ssub.s32 %s149, %s150
      %p152 = scmp.eq.s32.totalorder %s151, 0
      %s154 = sadd.s32 %s153, 1
      %s155 = scalar_select %p152, %s153, %s154
      %p158 = pneg %p152
      %p159 = scmp.eq.s32.totalorder %s24, 1
      %p160 = por %p158, %p159
      %p161 = scmp.ne.s32.totalorder %s153, %s156
      %p162 = scmp.eq.s32.totalorder %s24, 0
      %p163 = por %p161, %p162
      %p164 = scmp.ne.s32.totalorder %s153, %s156
      %p165 = scmp.eq.s32.totalorder %s29, 1
      %p166 = por %p164, %p165
      %p167 = scmp.ne.s32.totalorder %s156, %s157
      %p168 = scmp.eq.s32.totalorder %s29, 0
      %p169 = por %p167, %p168
      %p170 = scmp.ne.s32.totalorder %s156, %s157
      %p171 = scmp.eq.s32.totalorder %s30, 1
      %p172 = por %p170, %p171
      %p174 = scmp.ne.s32.totalorder %s157, %s173
      %p175 = scmp.eq.s32.totalorder %s30, 0
      %p176 = por %p174, %p175
      %s177 = ssub.s32 %s31, %s43
      %p178 = scmp.eq.s32.totalorder %s177, 0
      %s180 = sadd.s32 %s179, 1
      %s181 = scalar_select %p178, %s179, %s180
      %p184 = pneg %p178
      %p185 = scmp.eq.s32.totalorder %s24, 1
      %p186 = por %p184, %p185
      %p187 = scmp.ne.s32.totalorder %s179, %s182
      %p188 = scmp.eq.s32.totalorder %s24, 0
      %p189 = por %p187, %p188
      %p190 = scmp.ne.s32.totalorder %s179, %s182
      %p191 = scmp.eq.s32.totalorder %s29, 1
      %p192 = por %p190, %p191
      %p193 = scmp.ne.s32.totalorder %s182, %s183
      %p194 = scmp.eq.s32.totalorder %s29, 0
      %p195 = por %p193, %p194
      %p196 = scmp.ne.s32.totalorder %s182, %s183
      %p197 = scmp.eq.s32.totalorder %s30, 1
      %p198 = por %p196, %p197
      %p200 = scmp.ne.s32.totalorder %s183, %s199
      %p201 = scmp.eq.s32.totalorder %s30, 0
      %p202 = por %p200, %p201
      %p203 = scmp.le.s32.totalorder 1, %s24
      %p204 = scmp.lt.s32.totalorder %s24, 3
      %p205 = pnand %p203, %p204
      %p206 = pneg %p205
      // Predicated region
      $region9: #{tpu_custom_call.1} parent=5 // pred_check
        _
      $region10: #{tpu_custom_call.1} parent=5 // pred_check_branch
        %208 = sbr.rel (%p205) target = $region12
      $region11: #{tpu_custom_call.1} parent=5 // pred_region
        %s209 = ssub.s32 %s24, 1
        // Predicated region
        $region13: #{tpu_custom_call.1} parent=11 // pred_check
          %p210 = pneg %p57
        $region14: #{tpu_custom_call.1} parent=11 // pred_check_branch
          %212 = sbr.rel (%p210) target = $region16
        $region15: #{tpu_custom_call.1} parent=11 // pred_region
          _
        $region16: #{tpu_custom_call.1} parent=11 // pred_fallthru
          _
      $region12: #{tpu_custom_call.1} parent=5 // pred_fallthru
        _
      %p213 = scmp.lt.s32.totalorder %s24, 2
      // Predicated region
      $region17: #{tpu_custom_call.1} parent=5 // pred_check
        %p214 = pneg %p213
      $region18: #{tpu_custom_call.1} parent=5 // pred_check_branch
        %216 = sbr.rel (%p214) target = $region20
      $region19: #{tpu_custom_call.1} parent=5 // pred_region
        // Predicated region
        $region21: #{tpu_custom_call.1} parent=19 // pred_check
          %p217 = pneg %p79
        $region22: #{tpu_custom_call.1} parent=19 // pred_check_branch
          %219 = sbr.rel (%p217) target = $region24
        $region23: #{tpu_custom_call.1} parent=19 // pred_region
          %s220 = sand.u32 %s69, 1
          %s221 = scalar_lea.sflag [#allocation5], %s220
          %s222 = sand.u32 %s69, 1
          %s223 = smul.addr %s222, 8
          %s224 = scalar_lea.vmem [#allocation4], %s223
          %s225 = sadd.s32 %s31, %s32
          %s227 = ssub.s32 128, 128
          %228 = vsyncadd %s221, %s227
          %s229 = smul.addr %s225, 128
          %s230 = scalar_lea.hbm %s1, %s229
          %s232 = sshll.u32 %s224, 4
          %s233 = int_to_ptr.vmem [resolvable:$true] %s232
          %235 = dma.hbm_to_vmem [thread:$0]  %s230, 128, %s233, %s221
        $region24: #{tpu_custom_call.1} parent=19 // pred_fallthru
          _
        // Predicated region
        $region25: #{tpu_custom_call.1} parent=19 // pred_check
          %p236 = pneg %p107
        $region26: #{tpu_custom_call.1} parent=19 // pred_check_branch
          %238 = sbr.rel (%p236) target = $region28
        $region27: #{tpu_custom_call.1} parent=19 // pred_region
          %s239 = sand.u32 %s24, 1
          %s240 = scalar_lea.sflag [#allocation8], %s239
          %s241 = sand.u32 %s97, 1
          %s242 = smul.addr %s241, 8
          %s243 = scalar_lea.vmem [#allocation7], %s242
          %s244 = sadd.s32 %s31, %s32
          %s246 = ssub.s32 128, 128
          %247 = vsyncadd %s240, %s246
          %s248 = smul.addr %s244, 128
          %s249 = scalar_lea.hbm %s2, %s248
          %s251 = sshll.u32 %s243, 4
          %s252 = int_to_ptr.vmem [resolvable:$true] %s251
          %254 = dma.hbm_to_vmem [thread:$0]  %s249, 128, %s252, %s240
        $region28: #{tpu_custom_call.1} parent=19 // pred_fallthru
          _
        // Predicated region
        $region29: #{tpu_custom_call.1} parent=19 // pred_check
          %p255 = pneg %p135
        $region30: #{tpu_custom_call.1} parent=19 // pred_check_branch
          %257 = sbr.rel (%p255) target = $region32
        $region31: #{tpu_custom_call.1} parent=19 // pred_region
          %s258 = sand.u32 %s24, 1
          %s259 = scalar_lea.sflag [#allocation8], %s258
          %s260 = sand.u32 %s125, 1
          %s261 = smul.addr %s260, 8
          %s262 = scalar_lea.vmem [#allocation9], %s261
          %s263 = sadd.s32 %s31, %s32
          %s265 = ssub.s32 128, 128
          %266 = vsyncadd %s259, %s265
          %s267 = smul.addr %s263, 128
          %s268 = scalar_lea.hbm %s3, %s267
          %s270 = sshll.u32 %s262, 4
          %s271 = int_to_ptr.vmem [resolvable:$true] %s270
          %273 = dma.hbm_to_vmem [thread:$0]  %s268, 128, %s271, %s259
        $region32: #{tpu_custom_call.1} parent=19 // pred_fallthru
          _
        // Predicated region
        $region33: #{tpu_custom_call.1} parent=19 // pred_check
          %p274 = pneg %p163
        $region34: #{tpu_custom_call.1} parent=19 // pred_check_branch
          %276 = sbr.rel (%p274) target = $region36
        $region35: #{tpu_custom_call.1} parent=19 // pred_region
          %s277 = sand.u32 %s153, 1
          %s278 = scalar_lea.sflag [#allocation11], %s277
          %s279 = sand.u32 %s153, 1
          %s280 = smul.addr %s279, 8
          %s281 = scalar_lea.vmem [#allocation10], %s280
          %s282 = sadd.s32 %s31, %s32
          %s284 = ssub.s32 128, 128
          %285 = vsyncadd %s278, %s284
          %s286 = smul.addr %s282, 128
          %s287 = scalar_lea.hbm %s4, %s286
          %s289 = sshll.u32 %s281, 4
          %s290 = int_to_ptr.vmem [resolvable:$true] %s289
          %292 = dma.hbm_to_vmem [thread:$0]  %s287, 128, %s290, %s278
        $region36: #{tpu_custom_call.1} parent=19 // pred_fallthru
          _
      $region20: #{tpu_custom_call.1} parent=5 // pred_fallthru
        _
      %p293 = scmp.le.s32.totalorder 1, %s24
      %p294 = scmp.lt.s32.totalorder %s24, 3
      %p295 = pnand %p293, %p294
      %p296 = pneg %p295
      // Predicated region
      $region37: #{tpu_custom_call.1} parent=5 // pred_check
        _
      $region38: #{tpu_custom_call.1} parent=5 // pred_check_branch
        %298 = sbr.rel (%p295) target = $region40
      $region39: #{tpu_custom_call.1} parent=5 // pred_region
        %s299 = ssub.s32 %s24, 1
        %s300 = sand.u32 %s72, 1
        %s301 = scalar_lea.sflag [#allocation5], %s300
        %s302 = sand.u32 %s72, 1
        %s303 = smul.addr %s302, 8
        %s304 = scalar_lea.vmem [#allocation4], %s303
        // Predicated region
        $region41: #{tpu_custom_call.1} parent=39 // pred_check
          %p305 = pneg %p85
        $region42: #{tpu_custom_call.1} parent=39 // pred_check_branch
          %307 = sbr.rel (%p305) target = $region44
        $region43: #{tpu_custom_call.1} parent=39 // pred_region
          %308 = dma.done %s301, 128
        $region44: #{tpu_custom_call.1} parent=39 // pred_fallthru
          _
        %s309 = sand.u32 %s29, 1
        %s310 = scalar_lea.sflag [#allocation8], %s309
        %s311 = sand.u32 %s100, 1
        %s312 = smul.addr %s311, 8
        %s313 = scalar_lea.vmem [#allocation7], %s312
        // Predicated region
        $region45: #{tpu_custom_call.1} parent=39 // pred_check
          %p314 = pneg %p113
        $region46: #{tpu_custom_call.1} parent=39 // pred_check_branch
          %316 = sbr.rel (%p314) target = $region48
        $region47: #{tpu_custom_call.1} parent=39 // pred_region
          %317 = dma.done %s310, 128
        $region48: #{tpu_custom_call.1} parent=39 // pred_fallthru
          _
        %s318 = sand.u32 %s29, 1
        %s319 = scalar_lea.sflag [#allocation8], %s318
        %s320 = sand.u32 %s128, 1
        %s321 = smul.addr %s320, 8
        %s322 = scalar_lea.vmem [#allocation9], %s321
        // Predicated region
        $region49: #{tpu_custom_call.1} parent=39 // pred_check
          %p323 = pneg %p141
        $region50: #{tpu_custom_call.1} parent=39 // pred_check_branch
          %325 = sbr.rel (%p323) target = $region52
        $region51: #{tpu_custom_call.1} parent=39 // pred_region
          %326 = dma.done %s319, 128
        $region52: #{tpu_custom_call.1} parent=39 // pred_fallthru
          _
        %s327 = sand.u32 %s156, 1
        %s328 = scalar_lea.sflag [#allocation11], %s327
        %s329 = sand.u32 %s156, 1
        %s330 = smul.addr %s329, 8
        %s331 = scalar_lea.vmem [#allocation10], %s330
        // Predicated region
        $region53: #{tpu_custom_call.1} parent=39 // pred_check
          %p332 = pneg %p169
        $region54: #{tpu_custom_call.1} parent=39 // pred_check_branch
          %334 = sbr.rel (%p332) target = $region56
        $region55: #{tpu_custom_call.1} parent=39 // pred_region
          %335 = dma.done %s328, 128
        $region56: #{tpu_custom_call.1} parent=39 // pred_fallthru
          _
        %p336 = pneg %p57
        %p337 = pneg %p54
        %s338 = sand.u32 %s72, 1
        %s339 = scalar_lea.sflag [#allocation5], %s338
        %s340 = sand.u32 %s72, 1
        %s341 = smul.addr %s340, 8
        %s342 = scalar_lea.vmem [#allocation4], %s341
        %p343 = pneg %p85
        %p344 = pneg %p82
        %s345 = sand.u32 %s29, 1
        %s346 = scalar_lea.sflag [#allocation8], %s345
        %s347 = sand.u32 %s100, 1
        %s348 = smul.addr %s347, 8
        %s349 = scalar_lea.vmem [#allocation7], %s348
        %p350 = pneg %p113
        %p351 = pneg %p110
        %s352 = sand.u32 %s29, 1
        %s353 = scalar_lea.sflag [#allocation8], %s352
        %s354 = sand.u32 %s128, 1
        %s355 = smul.addr %s354, 8
        %s356 = scalar_lea.vmem [#allocation9], %s355
        %p357 = pneg %p141
        %p358 = pneg %p138
        %s359 = sand.u32 %s156, 1
        %s360 = scalar_lea.sflag [#allocation11], %s359
        %s361 = sand.u32 %s156, 1
        %s362 = smul.addr %s361, 8
        %s363 = scalar_lea.vmem [#allocation10], %s362
        %p364 = pneg %p169
        %p365 = pneg %p166
        %p366 = pneg %p195
        %p367 = pneg %p192
        %s368 = sand.u32 %s182, 1
        %s369 = scalar_lea.sflag [#allocation6], %s368
        %s370 = sand.u32 %s182, 1
        %s371 = smul.addr %s370, 8
        %s372 = scalar_lea.vmem [#allocation12], %s371
        %s373 = sadd.s32 %s33, %s34
        %s374 = sadd.s32 %s33, %s34
        %s375 = sadd.s32 %s33, %s34
        %s376 = sadd.s32 %s33, %s34
        %p377 = scmp.eq.s32.totalorder %s34, 0
        // Predicated region
        $region57: #{tpu_custom_call.1} parent=39 // pred_check
          %p378 = pneg %p377
        $region58: #{tpu_custom_call.1} parent=39 // pred_check_branch
          %380 = sbr.rel (%p378) target = $region60
        $region59: #{tpu_custom_call.1} parent=39 // pred_region
          %381 = vst [vmem:[#allocation2] sm:$0xff] 0.0
        $region60: #{tpu_custom_call.1} parent=39 // pred_fallthru
          _
        %s382 = sld [smem:[#allocation3]]
        %v383 = vld [vmem:[%s331] sm:$0xff]
        %v384 = vadd.f32 %v383, 0.01
        %v385 = vmul.f32 %v384, 0.98039216
        %v386 = vld [vmem:[%s322] sm:$0xff]
        %v387 = vsub.f32 %v386, %v385
        %v388 = vsub.f32 1.0, %v385
        %v389 = vmul.f32 %v385, %v388
        %v390 = vrcp.pop %v389
        %v391 = vmul.f32 %v387, %v390
        %v392 = vld [vmem:[%s304] sm:$0xff]
        %v393 = vld [vmem:[%s313] sm:$0xff]
        %v394 = vstv %s382
        %v395 = vmul.f32 %v391, %v394
        %v396 = vadd.f32 %v393, %v395
        %v397 = vsub.f32 %v392, %v396
        %s398 = sadd.s32 %s33, %s34
        %s399 = smul.u32 %s398, 8
        %v400 = vlaneseq
        %v401 = vshrl.u32 %v400, 7
        %v402 = vstv %s399
        %v403 = vadd.s32 %v401, %v402
        %v404 = vlaneseq
        %v405 = vand.u32 %v404, 127
        %v406 = vmul.u32 %v403, 128
        %v407 = vadd.s32 %v406, %v405
        %vm408 = vcmp.lt.s32.totalorder %v407, 8
        %v409 = vsel %vm408, %v397, 0.0
        %v410 = vld [vmem:[#allocation2] sm:$0xff]
        %v411 = vmul.f32 %v409, %v409
        %v412 = vadd.f32 %v410, %v411
        %413 = vst [vmem:[#allocation2] sm:$0xff] %v412
        // Predicated region
        $region61: #{tpu_custom_call.1} parent=39 // pred_check
          %p414 = pneg %p377
        $region62: #{tpu_custom_call.1} parent=39 // pred_check_branch
          %416 = sbr.rel (%p414) target = $region64
        $region63: #{tpu_custom_call.1} parent=39 // pred_region
          %v417 = vld [vmem:[#allocation2] sm:$0xff]
          %418 = vadd.xlane.f32.xlu0 %v417
          %v419 = vpop.xlane.xlu0 %418
          %v420 = vrot.slane %v419, 4
          %v421 = vadd.f32 %v419, %v420
          %v422 = vrot.slane %v421, 2
          %v423 = vadd.f32 %v421, %v422
          %v424 = vrot.slane %v423, 1
          %v425 = vadd.f32 %v423, %v424
          %s426 = vtos %v425
          %vm427 = vcmp.eq.s32.totalorder %v401, 0
          %vm428 = vcmp.eq.s32.totalorder %v405, 0
          %vm429 = vmand %vm427, %vm428
          %v430 = vstv %s426
          %v431 = vsel %vm429, %v430, 0.0
          %432 = vst [vmem:[%s372] sm:$0xff] %v431
        $region64: #{tpu_custom_call.1} parent=39 // pred_fallthru
          _
        %s433 = sand.u32 %s182, 1
        %s434 = scalar_lea.sflag [#allocation6], %s433
        %s435 = sand.u32 %s182, 1
        %s436 = smul.addr %s435, 8
        %s437 = scalar_lea.vmem [#allocation12], %s436
        // Predicated region
        $region65: #{tpu_custom_call.1} parent=39 // pred_check
          %p438 = pneg %p192
        $region66: #{tpu_custom_call.1} parent=39 // pred_check_branch
          %440 = sbr.rel (%p438) target = $region68
        $region67: #{tpu_custom_call.1} parent=39 // pred_region
          %s442 = ssub.s32 128, 128
          %443 = vsyncadd %s434, %s442
          %s444 = smul.addr %s33, 128
          %s445 = scalar_lea.hbm %s5, %s444
          %s447 = sshll.u32 %s437, 4
          %s448 = int_to_ptr.vmem [resolvable:$true] %s447
          %450 = dma.vmem_to_hbm [thread:$0]  %s448, 128, %s445, %s434
        $region68: #{tpu_custom_call.1} parent=39 // pred_fallthru
          _
      $region40: #{tpu_custom_call.1} parent=5 // pred_fallthru
        _
      %p451 = scmp.le.s32.totalorder 2, %s24
      // Predicated region
      $region69: #{tpu_custom_call.1} parent=5 // pred_check
        %p452 = pneg %p451
      $region70: #{tpu_custom_call.1} parent=5 // pred_check_branch
        %454 = sbr.rel (%p452) target = $region72
      $region71: #{tpu_custom_call.1} parent=5 // pred_region
        %s455 = ssub.s32 %s24, 2
        // Predicated region
        $region73: #{tpu_custom_call.1} parent=71 // pred_check
          %p456 = pneg %p198
        $region74: #{tpu_custom_call.1} parent=71 // pred_check_branch
          %458 = sbr.rel (%p456) target = $region76
        $region75: #{tpu_custom_call.1} parent=71 // pred_region
          %s459 = sand.u32 %s183, 1
          %s460 = scalar_lea.sflag [#allocation6], %s459
          %s461 = sand.u32 %s183, 1
          %s462 = smul.addr %s461, 8
          %s463 = scalar_lea.vmem [#allocation12], %s462
          %464 = dma.done %s460, 128
        $region76: #{tpu_custom_call.1} parent=71 // pred_fallthru
          _
      $region72: #{tpu_custom_call.1} parent=5 // pred_fallthru
        _
    $region6: #{tpu_custom_call.1} parent=1 // loop_footer
      %s28 = sadd.s32 1, %s24
    $region7: #{tpu_custom_call.1} parent=1 // loop_footer_branch
      %23 = sbr.rel target = $region3
    $region8: #{tpu_custom_call.1} parent=1 // loop_exit
      _
    %465 = vsyncpa [#allocation5], 1
    %s466 = scalar_lea.sflag [#allocation5], 1
    %467 = vsyncpa %s466, 1
    %468 = vsyncpa [#allocation8], 1
    %s469 = scalar_lea.sflag [#allocation8], 1
    %470 = vsyncpa %s469, 1
    %471 = vsyncpa [#allocation11], 1
    %s472 = scalar_lea.sflag [#allocation11], 1
    %473 = vsyncpa %s472, 1
    %474 = vsyncpa [#allocation6], 1
    %s475 = scalar_lea.sflag [#allocation6], 1
    %476 = vsyncpa %s475, 1

</llo_original>
